<compile_context>
chip_gen: v5e
topology: v5e:2x2
jax: 0.10.0
libtpu: 0.0.40
codegen_flags: <defaults>
</compile_context>

<pallas_src>
import math

import jax
import jax.numpy as jnp
from jax.experimental import pallas as pl
from jax.experimental.pallas import tpu as pltpu


def _round_up(x: int, m: int) -> int:
    return (x + m - 1) // m * m


def _tpu_vmem_capacity() -> int:
    try:
        info = pltpu.get_tpu_info()
        cap = getattr(info, "vmem_capacity_bytes", None)
        if cap:
            return int(cap)
    except Exception:
        pass
    return 64 * 1024 * 1024          # conservative default (v7x-sized)


def _select_tiles(B, N, Pp, D1p, D2p, x_isz, w_isz, o_isz, has_bias, sub, budget):
    """Pick (tp, tn, tk). tk is None for the single-K (no accumulator) kernel.

    Tiles are divisors of the 128/sublane-rounded dims, so no extra padding is
    ever introduced beyond the alignment rounding.
    """
    tp_cands = sorted(
        [t for t in range(sub, min(Pp, 512) + 1, sub) if Pp % t == 0], reverse=True)
    tn_cands = sorted(
        [t for t in range(128, D2p + 1, 128) if D2p % t == 0], reverse=True)
    b_isz = w_isz if has_bias else 0

    def fits(tp, tn, tk):
        # double-buffered x/w/out/bias blocks + f32 epilogue tile
        buf = 2 * (tp * tk * x_isz + tk * tn * w_isz + tp * tn * o_isz + tn * b_isz)
        return buf + tp * tn * 4 <= budget

    x_total = B * N * Pp * D1p * x_isz
    best = None
    for tp in tp_cands:
        for tn in tn_cands:
            if not fits(tp, tn, D1p):
                continue
            n_j = D2p // tn
            steps = N * n_j * B * (Pp // tp)
            # x is re-streamed once per D2 tile; ~0.35us/step overhead in byte-equiv.
            score = n_j * x_total + steps * 400_000
            if best is None or score < best[0]:
                best = (score, tp, tn)
    if best is not None:
        return best[1], best[2], None

    # Fallback for extreme D1: tile K and accumulate in VMEM scratch.
    tk_cands = sorted(
        [t for t in range(128, D1p + 1, 128) if D1p % t == 0], reverse=True)
    for tp in tp_cands:
        for tn in tn_cands:
            for tk in tk_cands:
                if fits(tp, tn, tk):
                    return tp, tn, tk
    return tp_cands[-1], tn_cands[-1], tk_cands[-1]


# --------------------------- kernel bodies ----------------------------------


def _expert_matmul_bias_kernel(x_ref, w_ref, b_ref, o_ref):
    # x_ref: (1, 1, tp, D1p)  w_ref: (1, D1p, tn)  b_ref: (1, 1, tn)  o_ref: (1, 1, tp, tn)
    acc = jnp.dot(x_ref[0, 0], w_ref[0], preferred_element_type=jnp.float32)
    acc = acc + b_ref[0].astype(jnp.float32)
    o_ref[0, 0] = acc.astype(o_ref.dtype)


def _expert_matmul_kernel(x_ref, w_ref, o_ref):
    acc = jnp.dot(x_ref[0, 0], w_ref[0], preferred_element_type=jnp.float32)
    o_ref[0, 0] = acc.astype(o_ref.dtype)


def _expert_matmul_ktiled_kernel(x_ref, w_ref, b_ref, o_ref, acc_ref):
    # Fallback for very large D1: accumulate over the K grid axis (innermost).
    k = pl.program_id(4)

    @pl.when(k == 0)
    def _init():
        acc_ref[...] = jnp.broadcast_to(b_ref[0].astype(jnp.float32), acc_ref.shape)

    acc_ref[...] += jnp.dot(x_ref[0, 0], w_ref[0], preferred_element_type=jnp.float32)

    @pl.when(k == pl.num_programs(4) - 1)
    def _store():
        o_ref[0, 0] = acc_ref[...].astype(o_ref.dtype)


# ------------------------------- wrapper -------------------------------------


def multi_expert_layer(x, weight, bias=None, *, compute_dtype=None):
    """Pallas implementation of MultiExpertLayer.forward.

    Args:
      x:      (B, N, P, D1) or (B, N, D1)
      weight: (N, D1, D2)
      bias:   (N, D2) or None
      compute_dtype: optional dtype (e.g. jnp.bfloat16) to cast x/weight for the
        MXU; accumulation is always f32.
    Returns:
      (B, N, P, D2) or (B, N, D2), matching the input rank.
    """
    if x.ndim not in (3, 4):
        raise ValueError(f"Expected 3-D or 4-D input, got {x.ndim}-D")
    squeeze_tokens = x.ndim == 3
    if squeeze_tokens:
        x = x[:, :, None, :]                              # (B, N, 1, D1)  (free)
    B, N, P, D1 = x.shape
    Nw, D1w, D2 = weight.shape
    if N != Nw or D1 != D1w:
        raise ValueError("shape mismatch between x and weight")
    if bias is not None and bias.shape != (N, D2):
        raise ValueError("bad bias shape")

    if compute_dtype is not None:
        x = x.astype(compute_dtype)
        weight = weight.astype(compute_dtype)
    out_dtype = x.dtype

    x_isz = x.dtype.itemsize
    w_isz = weight.dtype.itemsize
    o_isz = jnp.dtype(out_dtype).itemsize
    sub = {4: 8, 2: 16, 1: 32}.get(x_isz, 8)              # sublane pack of the dtype

    D1p = _round_up(D1, 128)
    D2p = _round_up(D2, 128)
    Pp = _round_up(P, sub)

    vmem_cap = _tpu_vmem_capacity()
    budget = vmem_cap // 2                                # headroom for Mosaic scratch
    vmem_limit = vmem_cap * 3 // 4

    tp, tn, tk = _select_tiles(B, N, Pp, D1p, D2p, x_isz, w_isz, o_isz,
                               bias is not None, sub, budget)

    # Pad only when the dims are actually unaligned (zero K padding is inert).
    x_p = x if (Pp == P and D1p == D1) else jnp.pad(
        x, ((0, 0), (0, 0), (0, Pp - P), (0, D1p - D1)))
    w_p = weight if (D1p == D1 and D2p == D2) else jnp.pad(
        weight, ((0, 0), (0, D1p - D1), (0, D2p - D2)))

    has_bias = bias is not None
    ktiled = tk is not None
    if ktiled and not has_bias:
        # Rare fallback path: a zero bias keeps the accumulator-seeding kernel simple.
        bias = jnp.zeros((N, D2), dtype=weight.dtype)
        has_bias = True
    b_p = None
    if has_bias:
        b_p = bias.reshape(N, 1, D2)
        if D2p != D2:
            b_p = jnp.pad(b_p, ((0, 0), (0, 0), (0, D2p - D2)))

    n_j = D2p // tn
    n_i = Pp // tp

    x_bytes = B * N * Pp * D1p * x_isz
    w_bytes = N * D1p * D2p * w_isz
    o_bytes = B * N * Pp * D2p * o_isz
    b_bytes = N * D2p * b_p.dtype.itemsize if has_bias else 0

    if not ktiled:
        grid = (N, n_j, B, n_i)
        in_specs = [
            pl.BlockSpec((1, 1, tp, D1p), lambda n, j, b, i: (b, n, i, 0)),
            pl.BlockSpec((1, D1p, tn), lambda n, j, b, i: (n, 0, j)),
        ]
        operands = [x_p, w_p]
        if has_bias:
            in_specs.append(pl.BlockSpec((1, 1, tn), lambda n, j, b, i: (n, 0, j)))
            operands.append(b_p)
            kernel = _expert_matmul_bias_kernel
        else:
            kernel = _expert_matmul_kernel
        out_spec = pl.BlockSpec((1, 1, tp, tn), lambda n, j, b, i: (b, n, i, j))
        scratch = []
        semantics = ("parallel", "parallel", "parallel", "parallel")
        # weight/bias fetched once per (expert, D2 tile); x re-streamed n_j times.
        bytes_accessed = n_j * x_bytes + w_bytes + b_bytes + o_bytes
    else:
        n_k = D1p // tk
        grid = (N, n_j, B, n_i, n_k)
        in_specs = [
            pl.BlockSpec((1, 1, tp, tk), lambda n, j, b, i, k: (b, n, i, k)),
            pl.BlockSpec((1, tk, tn), lambda n, j, b, i, k: (n, k, j)),
            pl.BlockSpec((1, 1, tn), lambda n, j, b, i, k: (n, 0, j)),
        ]
        operands = [x_p, w_p, b_p]
        kernel = _expert_matmul_ktiled_kernel
        out_spec = pl.BlockSpec((1, 1, tp, tn), lambda n, j, b, i, k: (b, n, i, j))
        scratch = [pltpu.VMEM((tp, tn), jnp.float32)]
        semantics = ("parallel", "parallel", "parallel", "parallel", "arbitrary")
        bytes_accessed = n_j * x_bytes + (B * n_i) * w_bytes + b_bytes + o_bytes

    cost = pl.CostEstimate(
        flops=2 * B * N * P * D1 * D2,     # un-padded: honest hint for ragged shapes
        transcendentals=0,
        bytes_accessed=int(bytes_accessed),
    )

    out_p = pl.pallas_call(
        kernel,
        out_shape=jax.ShapeDtypeStruct((B, N, Pp, D2p), out_dtype),
        grid_spec=pltpu.PrefetchScalarGridSpec(
            num_scalar_prefetch=0,
            grid=grid,
            in_specs=in_specs,
            out_specs=out_spec,
            scratch_shapes=scratch,
        ),
        compiler_params=pltpu.CompilerParams(
            dimension_semantics=semantics,
            vmem_limit_bytes=int(vmem_limit),
        ),
        cost_estimate=cost,
    )(*operands)

    out = out_p
    if Pp != P or D2p != D2:
        out = out[:, :, :P, :D2]
    if squeeze_tokens:
        out = out[:, :, 0, :]
    return out


def init_params(key, num_experts, in_features, out_features, dtype=jnp.float32):
    """Deterministic init mirroring PyTorch reset_parameters() semantics."""
    k_w, k_b = jax.random.split(key)
    fan_in = in_features * out_features
    gain = math.sqrt(2.0 / (1.0 + 5.0))
    w_bound = gain * math.sqrt(3.0 / fan_in)
    weight = jax.random.uniform(
        k_w, (num_experts, in_features, out_features),
        minval=-w_bound, maxval=w_bound, dtype=dtype)
    b_bound = 1.0 / math.sqrt(fan_in)
    bias = jax.random.uniform(
        k_b, (num_experts, out_features),
        minval=-b_bound, maxval=b_bound, dtype=dtype)
    return weight, bias


if __name__ == "__main__":
    # Small shapes consistent with the module's 4-D forward path:
    # batch B=2, num_experts N=4, tokens-per-expert P=8, in/out features 32/32.
    B, N, P, D1, D2 = 2, 4, 8, 32, 32

    key = jax.random.PRNGKey(0)
    k_x, k_params = jax.random.split(key)

    x = jax.random.normal(k_x, (B, N, P, D1), dtype=jnp.float32)
    weight, bias = init_params(k_params, N, D1, D2, dtype=jnp.float32)

    out = jax.block_until_ready(multi_expert_layer(x, weight, bias))
    ref = jnp.einsum("bnpd,nde->bnpe", x, weight) + bias[None, :, None, :]
    assert out.shape == (B, N, P, D2)
    assert jnp.allclose(out, ref, atol=1e-5, rtol=1e-5), "mismatch vs reference"

    # bias=None path (dedicated kernel, no zero-bias stream).
    out_nb = jax.block_until_ready(multi_expert_layer(x, weight, None))
    ref_nb = jnp.einsum("bnpd,nde->bnpe", x, weight)
    assert jnp.allclose(out_nb, ref_nb, atol=1e-5, rtol=1e-5), "no-bias mismatch"

    # 3-D path (b n d1 -> b n d2).
    x3 = jax.random.normal(k_x, (B, N, D1), dtype=jnp.float32)
    out3 = jax.block_until_ready(multi_expert_layer(x3, weight, bias))
    ref3 = jnp.einsum("bnd,nde->bne", x3, weight) + bias[None, :, :]
    assert jnp.allclose(out3, ref3, atol=1e-5, rtol=1e-5), "3-D mismatch vs reference"

    print("KERNEL_OK")
</pallas_src>

<mosaic_0001>
module attributes {stable_mosaic.version = 11 : i64} {
  func.func @_expert_matmul_bias_kernel(%arg0: i32, %arg1: i32, %arg2: i32, %arg3: i32, %arg4: memref<1x1x8x128xf32, #tpu.memory_space<vmem>>, %arg5: memref<1x128x128xf32, #tpu.memory_space<vmem>>, %arg6: memref<1x1x128xf32, #tpu.memory_space<vmem>>, %arg7: memref<1x1x8x128xf32, #tpu.memory_space<vmem>>) attributes {dimension_semantics = [#tpu.dimension_semantics<parallel>, #tpu.dimension_semantics<parallel>, #tpu.dimension_semantics<parallel>, #tpu.dimension_semantics<parallel>], iteration_bounds = array<i64: 4, 1, 2, 1>, scalar_prefetch = 0 : i64, scratch_operands = 0 : i64, tpu.core_type = #tpu.core_type<tc>, window_params = [{transform_indices = @transform_0, window_bounds = array<i64: 1, 1, 8, 128>}, {transform_indices = @transform_1, window_bounds = array<i64: 1, 128, 128>}, {transform_indices = @transform_2, window_bounds = array<i64: 1, 1, 128>}, {transform_indices = @transform_3, window_bounds = array<i64: 1, 1, 8, 128>}]} {
    %c0 = arith.constant 0 : index
    %c0_0 = arith.constant 0 : index
    %c0_1 = arith.constant 0 : index
    %c0_2 = arith.constant 0 : index
    %0 = vector.load %arg4[%c0, %c0_0, %c0_1, %c0_2] : memref<1x1x8x128xf32, #tpu.memory_space<vmem>>, vector<1x1x8x128xf32>
    %1 = vector.shape_cast %0 : vector<1x1x8x128xf32> to vector<8x128xf32>
    %c0_3 = arith.constant 0 : index
    %c0_4 = arith.constant 0 : index
    %c0_5 = arith.constant 0 : index
    %2 = vector.load %arg5[%c0_3, %c0_4, %c0_5] : memref<1x128x128xf32, #tpu.memory_space<vmem>>, vector<1x128x128xf32>
    %3 = vector.shape_cast %2 : vector<1x128x128xf32> to vector<128x128xf32>
    %cst = arith.constant dense<0.000000e+00> : vector<8x128xf32>
    %4 = tpu.matmul %1, %3, %cst {dimension_numbers = #tpu.dot_dimension_numbers<[1], [0], [0], [1], [0, 0, 1, 1], [], []>} : vector<8x128xf32>, vector<128x128xf32>, vector<8x128xf32> -> vector<8x128xf32>
    %c0_6 = arith.constant 0 : index
    %c0_7 = arith.constant 0 : index
    %c0_8 = arith.constant 0 : index
    %5 = vector.load %arg6[%c0_6, %c0_7, %c0_8] : memref<1x1x128xf32, #tpu.memory_space<vmem>>, vector<1x1x128xf32>
    %6 = vector.shape_cast %5 : vector<1x1x128xf32> to vector<1x128xf32>
    %7 = vector.broadcast %6 : vector<1x128xf32> to vector<8x128xf32>
    %8 = arith.addf %4, %7 : vector<8x128xf32>
    %c0_9 = arith.constant 0 : index
    %c0_10 = arith.constant 0 : index
    %c0_11 = arith.constant 0 : index
    %c0_12 = arith.constant 0 : index
    %9 = vector.load %arg7[%c0_9, %c0_10, %c0_11, %c0_12] : memref<1x1x8x128xf32, #tpu.memory_space<vmem>>, vector<1x1x8x128xf32>
    %10 = vector.shape_cast %9 : vector<1x1x8x128xf32> to vector<8x128xf32>
    %11 = vector.shape_cast %8 : vector<8x128xf32> to vector<1x1x8x128xf32>
    tpu.vector_store %arg7[%c0_9, %c0_10, %c0_11, %c0_12], %11 {strides = array<i32>} : memref<1x1x8x128xf32, #tpu.memory_space<vmem>>, vector<1x1x8x128xf32>,
    return
  }
  func.func @transform_0(%arg0: i32, %arg1: i32, %arg2: i32, %arg3: i32) -> (i32, i32, i32, i32) {
    %c0_i32 = arith.constant 0 : i32
    %c0_i32_0 = arith.constant 0 : i32
    return %arg2, %arg0, %arg3, %c0_i32 : i32, i32, i32, i32
  }
  func.func @transform_1(%arg0: i32, %arg1: i32, %arg2: i32, %arg3: i32) -> (i32, i32, i32) {
    %c0_i32 = arith.constant 0 : i32
    %c0_i32_0 = arith.constant 0 : i32
    return %arg0, %c0_i32, %arg1 : i32, i32, i32
  }
  func.func @transform_2(%arg0: i32, %arg1: i32, %arg2: i32, %arg3: i32) -> (i32, i32, i32) {
    %c0_i32 = arith.constant 0 : i32
    %c0_i32_0 = arith.constant 0 : i32
    return %arg0, %c0_i32, %arg1 : i32, i32, i32
  }
  func.func @transform_3(%arg0: i32, %arg1: i32, %arg2: i32, %arg3: i32) -> (i32, i32, i32, i32) {
    %c0_i32 = arith.constant 0 : i32
    return %arg2, %arg0, %arg3, %arg1 : i32, i32, i32, i32
  }
}

</mosaic_0001>

<llo_original>
// kernel: tpu_custom_call.1
$region0: #{tpu_custom_call.1}
  #allocation0 [shape = 'u32[]', space=smem, size = 0x4, offset = 0x4, fixed_abs, tag = 'smem constant byte address 0x4 - core index']
  #allocation1 [shape = 'u32[72,128]{1,0:T(1,128)}', space=vmem, size = 0x9000, scoped, tag = 'internal scratch']
  %s0 = inlined_call_operand.hbm [shape: f32[2,4,8,128], index: 0, kind: input, shape index: {}]
  %s1 = inlined_call_operand.hbm [shape: f32[4,128,128], index: 1, kind: input, shape index: {}]
  %s2 = inlined_call_operand.hbm [shape: f32[4,1,128], index: 2, kind: input, shape index: {}]
  %s3 = inlined_call_operand.hbm [shape: f32[2,4,8,128], index: 3, kind: output, shape index: {}]
  %s4 = sld [smem:[#allocation0]]
  $region57: #{tpu_custom_call.1} parent=0
    _
  %s6 = ssub.s32 1, %s4
  %s7 = scalar_select 0, %s6, %s4
  $region1: #{tpu_custom_call.1} parent=0
    #allocation2 [shape = 'u8[8192]{0}', space=vmem, size = 0x2000, scoped, tag = 'input window, operand 0']
    #allocation3 [shape = 's32[2]{0}', space=sflag, size = 0x8, scoped, tag = 'scoped memory for tpu_custom_call.1']
    #allocation4 [shape = 's32[2]{0}', space=sflag, size = 0x8, scoped, tag = 'scoped memory for tpu_custom_call.1']
    #allocation5 [shape = 'u8[131072]{0}', space=vmem, size = 0x20000, scoped, tag = 'input window, operand 1']
    #allocation6 [shape = 's32[2]{0}', space=sflag, size = 0x8, scoped, tag = 'scoped memory for tpu_custom_call.1']
    #allocation7 [shape = 'u8[1024]{0}', space=vmem, size = 0x400, scoped, tag = 'input window, operand 2']
    #allocation8 [shape = 'u8[8192]{0}', space=vmem, size = 0x2000, scoped, tag = 'output window, operand 0']
    %8 = vsyncpa [#allocation3], 0
    %s9 = scalar_lea.sflag [#allocation3], 1
    %10 = vsyncpa %s9, 0
    %11 = vsyncpa [#allocation6], 0
    %s12 = scalar_lea.sflag [#allocation6], 1
    %13 = vsyncpa %s12, 0
    %14 = vsyncpa [#allocation4], 0
    %s15 = scalar_lea.sflag [#allocation4], 1
    %16 = vsyncpa %s15, 0
    loop: start=0, step=1, limit=10
    $region2: #{tpu_custom_call.1} parent=1 // loop_pre_header
      _
    $region3: #{tpu_custom_call.1} parent=1 // loop_header
      %s18 = sphi 0, %s22
      %p19 = scmp.ge.s32.totalorder %s18, 10
      %s25 = sphi 0, %s51
      %s26 = sphi 0, %s47
      %s27 = sphi 0, %s43
      %s28 = sphi 0, %s39
      %s29 = sphi 0, %s25
      %s30 = sphi 0, %s26
      %s31 = sphi 0, %s27
      %s32 = sphi 0, %s28
      %s33 = sphi 0, %s29
      %s34 = sphi 0, %s30
      %s35 = sphi 0, %s31
      %s36 = sphi 0, %s32
      %s58 = sphi 0, %s60
      %s61 = sphi 0, %s58
      %s62 = sphi 0, %s61
      %s78 = sphi 0, %s62
      %s86 = sphi 0, %s88
      %s89 = sphi 0, %s86
      %s90 = sphi 0, %s89
      %s106 = sphi 0, %s90
      %s114 = sphi 0, %s116
      %s117 = sphi 0, %s114
      %s118 = sphi 0, %s117
      %s134 = sphi 0, %s118
      %s146 = sphi 0, %s148
      %s149 = sphi 0, %s146
      %s150 = sphi 0, %s149
      %s166 = sphi 0, %s150
    $region4: #{tpu_custom_call.1} parent=1 // loop_header_branch
      %21 = sbr.rel (%p19) target = $region8
    $region5: #{tpu_custom_call.1} parent=1 // loop_body
      %s23 = ssub.s32 %s18, 1
      %s24 = ssub.s32 %s18, 2
      %s37 = sadd.s32 1, %s28
      %p38 = scmp.ge.s32.totalorder %s37, 1
      %s39 = scalar_select %p38, 0, %s37
      %s40 = sadd.s32 1, %s27
      %s41 = scalar_select %p38, %s40, %s27
      %p42 = scmp.ge.s32.totalorder %s41, 2
      %s43 = scalar_select %p42, 0, %s41
      %s44 = sadd.s32 1, %s26
      %s45 = scalar_select %p42, %s44, %s26
      %p46 = scmp.ge.s32.totalorder %s45, 1
      %s47 = scalar_select %p46, 0, %s45
      %s48 = sadd.s32 1, %s25
      %s49 = scalar_select %p46, %s48, %s25
      %p50 = scmp.ge.s32.totalorder %s49, 4
      %s51 = scalar_select %p50, 0, %s49
      %s52 = ssub.s32 %s27, %s43
      %s53 = ssub.s32 %s25, %s51
      %s54 = sor.u32 %s52, %s53
      %s55 = ssub.s32 %s28, %s39
      %s56 = sor.u32 %s54, %s55
      %p57 = scmp.eq.s32.totalorder %s56, 0
      %s59 = sadd.s32 %s58, 1
      %s60 = scalar_select %p57, %s58, %s59
      %p63 = pneg %p57
      %p64 = scmp.eq.s32.totalorder %s18, 7
      %p65 = por %p63, %p64
      %p66 = scmp.ne.s32.totalorder %s58, %s61
      %p67 = scmp.eq.s32.totalorder %s18, 0
      %p68 = por %p66, %p67
      %p69 = scmp.ne.s32.totalorder %s58, %s61
      %p70 = scmp.eq.s32.totalorder %s23, 7
      %p71 = por %p69, %p70
      %p72 = scmp.ne.s32.totalorder %s61, %s62
      %p73 = scmp.eq.s32.totalorder %s23, 0
      %p74 = por %p72, %p73
      %p75 = scmp.ne.s32.totalorder %s61, %s62
      %p76 = scmp.eq.s32.totalorder %s24, 7
      %p77 = por %p75, %p76
      %p79 = scmp.ne.s32.totalorder %s62, %s78
      %p80 = scmp.eq.s32.totalorder %s24, 0
      %p81 = por %p79, %p80
      %s82 = ssub.s32 %s25, %s51
      %s83 = ssub.s32 %s26, %s47
      %s84 = sor.u32 %s82, %s83
      %p85 = scmp.eq.s32.totalorder %s84, 0
      %s87 = sadd.s32 %s86, 1
      %s88 = scalar_select %p85, %s86, %s87
      %p91 = pneg %p85
      %p92 = scmp.eq.s32.totalorder %s18, 7
      %p93 = por %p91, %p92
      %p94 = scmp.ne.s32.totalorder %s86, %s89
      %p95 = scmp.eq.s32.totalorder %s18, 0
      %p96 = por %p94, %p95
      %p97 = scmp.ne.s32.totalorder %s86, %s89
      %p98 = scmp.eq.s32.totalorder %s23, 7
      %p99 = por %p97, %p98
      %p100 = scmp.ne.s32.totalorder %s89, %s90
      %p101 = scmp.eq.s32.totalorder %s23, 0
      %p102 = por %p100, %p101
      %p103 = scmp.ne.s32.totalorder %s89, %s90
      %p104 = scmp.eq.s32.totalorder %s24, 7
      %p105 = por %p103, %p104
      %p107 = scmp.ne.s32.totalorder %s90, %s106
      %p108 = scmp.eq.s32.totalorder %s24, 0
      %p109 = por %p107, %p108
      %s110 = ssub.s32 %s25, %s51
      %s111 = ssub.s32 %s26, %s47
      %s112 = sor.u32 %s110, %s111
      %p113 = scmp.eq.s32.totalorder %s112, 0
      %s115 = sadd.s32 %s114, 1
      %s116 = scalar_select %p113, %s114, %s115
      %p119 = pneg %p113
      %p120 = scmp.eq.s32.totalorder %s18, 7
      %p121 = por %p119, %p120
      %p122 = scmp.ne.s32.totalorder %s114, %s117
      %p123 = scmp.eq.s32.totalorder %s18, 0
      %p124 = por %p122, %p123
      %p125 = scmp.ne.s32.totalorder %s114, %s117
      %p126 = scmp.eq.s32.totalorder %s23, 7
      %p127 = por %p125, %p126
      %p128 = scmp.ne.s32.totalorder %s117, %s118
      %p129 = scmp.eq.s32.totalorder %s23, 0
      %p130 = por %p128, %p129
      %p131 = scmp.ne.s32.totalorder %s117, %s118
      %p132 = scmp.eq.s32.totalorder %s24, 7
      %p133 = por %p131, %p132
      %p135 = scmp.ne.s32.totalorder %s118, %s134
      %p136 = scmp.eq.s32.totalorder %s24, 0
      %p137 = por %p135, %p136
      %s138 = ssub.s32 %s27, %s43
      %s139 = ssub.s32 %s25, %s51
      %s140 = sor.u32 %s138, %s139
      %s141 = ssub.s32 %s28, %s39
      %s142 = sor.u32 %s140, %s141
      %s143 = ssub.s32 %s26, %s47
      %s144 = sor.u32 %s142, %s143
      %p145 = scmp.eq.s32.totalorder %s144, 0
      %s147 = sadd.s32 %s146, 1
      %s148 = scalar_select %p145, %s146, %s147
      %p151 = pneg %p145
      %p152 = scmp.eq.s32.totalorder %s18, 7
      %p153 = por %p151, %p152
      %p154 = scmp.ne.s32.totalorder %s146, %s149
      %p155 = scmp.eq.s32.totalorder %s18, 0
      %p156 = por %p154, %p155
      %p157 = scmp.ne.s32.totalorder %s146, %s149
      %p158 = scmp.eq.s32.totalorder %s23, 7
      %p159 = por %p157, %p158
      %p160 = scmp.ne.s32.totalorder %s149, %s150
      %p161 = scmp.eq.s32.totalorder %s23, 0
      %p162 = por %p160, %p161
      %p163 = scmp.ne.s32.totalorder %s149, %s150
      %p164 = scmp.eq.s32.totalorder %s24, 7
      %p165 = por %p163, %p164
      %p167 = scmp.ne.s32.totalorder %s150, %s166
      %p168 = scmp.eq.s32.totalorder %s24, 0
      %p169 = por %p167, %p168
      %p170 = scmp.le.s32.totalorder 1, %s18
      %p171 = scmp.lt.s32.totalorder %s18, 9
      %p172 = pnand %p170, %p171
      %p173 = pneg %p172
      // Predicated region
      $region9: #{tpu_custom_call.1} parent=5 // pred_check
        _
      $region10: #{tpu_custom_call.1} parent=5 // pred_check_branch
        %175 = sbr.rel (%p172) target = $region12
      $region11: #{tpu_custom_call.1} parent=5 // pred_region
        %s176 = ssub.s32 %s18, 1
      $region12: #{tpu_custom_call.1} parent=5 // pred_fallthru
        _
      %p177 = scmp.lt.s32.totalorder %s18, 8
      // Predicated region
      $region13: #{tpu_custom_call.1} parent=5 // pred_check
        %p178 = pneg %p177
      $region14: #{tpu_custom_call.1} parent=5 // pred_check_branch
        %180 = sbr.rel (%p178) target = $region16
      $region15: #{tpu_custom_call.1} parent=5 // pred_region
        // Predicated region
        $region17: #{tpu_custom_call.1} parent=15 // pred_check
          %p181 = pneg %p68
        $region18: #{tpu_custom_call.1} parent=15 // pred_check_branch
          %183 = sbr.rel (%p181) target = $region20
        $region19: #{tpu_custom_call.1} parent=15 // pred_region
          %s184 = sand.u32 %s58, 1
          %s185 = scalar_lea.sflag [#allocation3], %s184
          %s186 = sand.u32 %s58, 1
          %s187 = smul.addr %s186, 8
          %s188 = scalar_lea.vmem [#allocation2], %s187
          %190 = vsyncadd %s185, 0
          %s191 = sadd.s32 %s28, %s25
          %s192 = smul.addr %s27, 4
          %s193 = sadd.s32 %s191, %s192
          %s194 = smul.addr %s193, 8
          %s195 = scalar_lea.hbm %s0, %s194
          %s197 = sshll.u32 %s195, 4
          %s198 = int_to_ptr.hbm [resolvable:$true] %s197
          %s199 = sshll.u32 %s188, 4
          %s200 = int_to_ptr.vmem [resolvable:$true] %s199
          %202 = dma.hbm_to_vmem [thread:$0]  %s198, 128, %s200, %s185
        $region20: #{tpu_custom_call.1} parent=15 // pred_fallthru
          _
        // Predicated region
        $region21: #{tpu_custom_call.1} parent=15 // pred_check
          %p203 = pneg %p96
        $region22: #{tpu_custom_call.1} parent=15 // pred_check_branch
          %205 = sbr.rel (%p203) target = $region24
        $region23: #{tpu_custom_call.1} parent=15 // pred_region
          %s206 = sand.u32 %s18, 1
          %s207 = scalar_lea.sflag [#allocation6], %s206
          %s208 = sand.u32 %s86, 1
          %s209 = smul.addr %s208, 128
          %s210 = scalar_lea.vmem [#allocation5], %s209
          %212 = vsyncadd %s207, 0
          %s213 = smul.addr %s25, 16
          %s214 = sadd.s32 %s26, %s213
          %s215 = smul.addr %s214, 8
          %s216 = scalar_lea.hbm %s1, %s215
          %s217 = sshll.u32 %s216, 4
          %s218 = int_to_ptr.hbm [resolvable:$true] %s217
          %s219 = sshll.u32 %s210, 4
          %s220 = int_to_ptr.vmem [resolvable:$true] %s219
          %225 = dma.hbm_to_vmem [thread:$0]  %s218, 2048, %s220, %s207, 128, 128, 8
        $region24: #{tpu_custom_call.1} parent=15 // pred_fallthru
          _
        // Predicated region
        $region25: #{tpu_custom_call.1} parent=15 // pred_check
          %p226 = pneg %p124
        $region26: #{tpu_custom_call.1} parent=15 // pred_check_branch
          %228 = sbr.rel (%p226) target = $region28
        $region27: #{tpu_custom_call.1} parent=15 // pred_region
          %s229 = sand.u32 %s18, 1
          %s230 = scalar_lea.sflag [#allocation6], %s229
          %s231 = sand.u32 %s114, 1
          %s232 = scalar_lea.vmem [#allocation7], %s231
          %234 = vsyncadd %s230, 0
          %s235 = sadd.s32 %s26, %s25
          %s236 = scalar_lea.hbm %s2, %s235
          %s238 = sshll.u32 %s236, 4
          %s239 = int_to_ptr.hbm [resolvable:$true] %s238
          %s240 = sshll.u32 %s232, 4
          %s241 = int_to_ptr.vmem [resolvable:$true] %s240
          %243 = dma.hbm_to_vmem [thread:$0]  %s239, 16, %s241, %s230
        $region28: #{tpu_custom_call.1} parent=15 // pred_fallthru
          _
      $region16: #{tpu_custom_call.1} parent=5 // pred_fallthru
        _
      %p244 = scmp.le.s32.totalorder 1, %s18
      %p245 = scmp.lt.s32.totalorder %s18, 9
      %p246 = pnand %p244, %p245
      %p247 = pneg %p246
      // Predicated region
      $region29: #{tpu_custom_call.1} parent=5 // pred_check
        _
      $region30: #{tpu_custom_call.1} parent=5 // pred_check_branch
        %249 = sbr.rel (%p246) target = $region32
      $region31: #{tpu_custom_call.1} parent=5 // pred_region
        %s250 = ssub.s32 %s18, 1
        %s251 = sand.u32 %s61, 1
        %s252 = scalar_lea.sflag [#allocation3], %s251
        %s253 = sand.u32 %s61, 1
        %s254 = smul.addr %s253, 8
        %s255 = scalar_lea.vmem [#allocation2], %s254
        // Predicated region
        $region33: #{tpu_custom_call.1} parent=31 // pred_check
          %p256 = pneg %p74
        $region34: #{tpu_custom_call.1} parent=31 // pred_check_branch
          %258 = sbr.rel (%p256) target = $region36
        $region35: #{tpu_custom_call.1} parent=31 // pred_region
          %260 = dma.done %s252, 128
        $region36: #{tpu_custom_call.1} parent=31 // pred_fallthru
          _
        %s261 = sand.u32 %s23, 1
        %s262 = scalar_lea.sflag [#allocation6], %s261
        %s263 = sand.u32 %s89, 1
        %s264 = smul.addr %s263, 128
        %s265 = scalar_lea.vmem [#allocation5], %s264
        // Predicated region
        $region37: #{tpu_custom_call.1} parent=31 // pred_check
          %p266 = pneg %p102
        $region38: #{tpu_custom_call.1} parent=31 // pred_check_branch
          %268 = sbr.rel (%p266) target = $region40
        $region39: #{tpu_custom_call.1} parent=31 // pred_region
          %270 = dma.done %s262, 2048
        $region40: #{tpu_custom_call.1} parent=31 // pred_fallthru
          _
        %s271 = sand.u32 %s23, 1
        %s272 = scalar_lea.sflag [#allocation6], %s271
        %s273 = sand.u32 %s117, 1
        %s274 = scalar_lea.vmem [#allocation7], %s273
        // Predicated region
        $region41: #{tpu_custom_call.1} parent=31 // pred_check
          %p275 = pneg %p130
        $region42: #{tpu_custom_call.1} parent=31 // pred_check_branch
          %277 = sbr.rel (%p275) target = $region44
        $region43: #{tpu_custom_call.1} parent=31 // pred_region
          %279 = dma.done %s272, 16
        $region44: #{tpu_custom_call.1} parent=31 // pred_fallthru
          _
        %s280 = sand.u32 %s61, 1
        %s281 = scalar_lea.sflag [#allocation3], %s280
        %s282 = sand.u32 %s61, 1
        %s283 = smul.addr %s282, 8
        %s284 = scalar_lea.vmem [#allocation2], %s283
        %p285 = pneg %p74
        %p286 = pneg %p71
        %s287 = sand.u32 %s23, 1
        %s288 = scalar_lea.sflag [#allocation6], %s287
        %s289 = sand.u32 %s89, 1
        %s290 = smul.addr %s289, 128
        %s291 = scalar_lea.vmem [#allocation5], %s290
        %p292 = pneg %p102
        %p293 = pneg %p99
        %s294 = sand.u32 %s23, 1
        %s295 = scalar_lea.sflag [#allocation6], %s294
        %s296 = sand.u32 %s117, 1
        %s297 = scalar_lea.vmem [#allocation7], %s296
        %p298 = pneg %p130
        %p299 = pneg %p127
        %p300 = pneg %p162
        %p301 = pneg %p159
        %s302 = sand.u32 %s149, 1
        %s303 = scalar_lea.sflag [#allocation4], %s302
        %s304 = sand.u32 %s149, 1
        %s305 = smul.addr %s304, 8
        %s306 = scalar_lea.vmem [#allocation8], %s305
        %v307 = vld [vmem:[%s255] sm:$0xff]
        %v308 = vld [vmem:[%s265] sm:$0xff]
        %v309 = vld [vmem:[%s265 + $0x8] sm:$0xff]
        %v310 = vld [vmem:[%s265 + $0x10] sm:$0xff]
        %v311 = vld [vmem:[%s265 + $0x18] sm:$0xff]
        %v312 = vld [vmem:[%s265 + $0x20] sm:$0xff]
        %v313 = vld [vmem:[%s265 + $0x28] sm:$0xff]
        %v314 = vld [vmem:[%s265 + $0x30] sm:$0xff]
        %v315 = vld [vmem:[%s265 + $0x38] sm:$0xff]
        %v316 = vld [vmem:[%s265 + $0x40] sm:$0xff]
        %v317 = vld [vmem:[%s265 + $0x48] sm:$0xff]
        %v318 = vld [vmem:[%s265 + $0x50] sm:$0xff]
        %v319 = vld [vmem:[%s265 + $0x58] sm:$0xff]
        %v320 = vld [vmem:[%s265 + $0x60] sm:$0xff]
        %v321 = vld [vmem:[%s265 + $0x68] sm:$0xff]
        %v322 = vld [vmem:[%s265 + $0x70] sm:$0xff]
        %v323 = vld [vmem:[%s265 + $0x78] sm:$0xff]
        %v324 = vld [vmem:[%s274] sm:$0x1]
        %v326 = vperm.slane %v324, 0
        %328 = vmatpush.msra.mxu0 %v323
        %329 = vmatpush.msra.mxu0 %v322
        %330 = vmatpush.msra.mxu0 %v321
        %331 = vmatpush.msra.mxu0 %v320
        %332 = vmatpush.msra.mxu0 %v319
        %333 = vmatpush.msra.mxu0 %v318
        %334 = vmatpush.msra.mxu0 %v317
        %335 = vmatpush.msra.mxu0 %v316
        %336 = vmatpush.msra.mxu0 %v315
        %337 = vmatpush.msra.mxu0 %v314
        %338 = vmatpush.msra.mxu0 %v313
        %339 = vmatpush.msra.mxu0 %v312
        %340 = vmatpush.msra.mxu0 %v311
        %341 = vmatpush.msra.mxu0 %v310
        %342 = vmatpush.msra.mxu0 %v309
        %343 = vmatpush.msra.mxu0 %v308
        %344 = vmatmul.f32.gmra.mxu0 %v307
        %v345 = vpop.f32.mrf.mxu0
        %v346 = vadd.f32 %v326, %v345
        %347 = vdwg.mxu0
        %348 = vst [vmem:[%s306] sm:$0xff] %v346
        %s349 = sand.u32 %s149, 1
        %s350 = scalar_lea.sflag [#allocation4], %s349
        %s351 = sand.u32 %s149, 1
        %s352 = smul.addr %s351, 8
        %s353 = scalar_lea.vmem [#allocation8], %s352
        // Predicated region
        $region45: #{tpu_custom_call.1} parent=31 // pred_check
          %p354 = pneg %p159
        $region46: #{tpu_custom_call.1} parent=31 // pred_check_branch
          %356 = sbr.rel (%p354) target = $region48
        $region47: #{tpu_custom_call.1} parent=31 // pred_region
          %358 = vsyncadd %s350, 0
          %s359 = sadd.s32 %s30, %s32
          %s360 = sadd.s32 %s359, %s29
          %s361 = smul.addr %s31, 4
          %s362 = sadd.s32 %s360, %s361
          %s363 = smul.addr %s362, 8
          %s364 = scalar_lea.hbm %s3, %s363
          %s366 = sshll.u32 %s353, 4
          %s367 = int_to_ptr.vmem [resolvable:$true] %s366
          %s368 = sshll.u32 %s364, 4
          %s369 = int_to_ptr.hbm [resolvable:$true] %s368
          %371 = dma.vmem_to_hbm [thread:$0]  %s367, 128, %s369, %s350
        $region48: #{tpu_custom_call.1} parent=31 // pred_fallthru
          _
      $region32: #{tpu_custom_call.1} parent=5 // pred_fallthru
        _
      %p372 = scmp.le.s32.totalorder 2, %s18
      // Predicated region
      $region49: #{tpu_custom_call.1} parent=5 // pred_check
        %p373 = pneg %p372
      $region50: #{tpu_custom_call.1} parent=5 // pred_check_branch
        %375 = sbr.rel (%p373) target = $region52
      $region51: #{tpu_custom_call.1} parent=5 // pred_region
        %s376 = ssub.s32 %s18, 2
        // Predicated region
        $region53: #{tpu_custom_call.1} parent=51 // pred_check
          %p377 = pneg %p165
        $region54: #{tpu_custom_call.1} parent=51 // pred_check_branch
          %379 = sbr.rel (%p377) target = $region56
        $region55: #{tpu_custom_call.1} parent=51 // pred_region
          %s380 = sand.u32 %s150, 1
          %s381 = scalar_lea.sflag [#allocation4], %s380
          %s382 = sand.u32 %s150, 1
          %s383 = smul.addr %s382, 8
          %s384 = scalar_lea.vmem [#allocation8], %s383
          %386 = dma.done %s381, 128
        $region56: #{tpu_custom_call.1} parent=51 // pred_fallthru
          _
      $region52: #{tpu_custom_call.1} parent=5 // pred_fallthru
        _
    $region6: #{tpu_custom_call.1} parent=1 // loop_footer
      %s22 = sadd.s32 1, %s18
    $region7: #{tpu_custom_call.1} parent=1 // loop_footer_branch
      %17 = sbr.rel target = $region3
    $region8: #{tpu_custom_call.1} parent=1 // loop_exit
      _
    %387 = vsyncpa [#allocation3], 1
    %s388 = scalar_lea.sflag [#allocation3], 1
    %389 = vsyncpa %s388, 1
    %390 = vsyncpa [#allocation6], 1
    %s391 = scalar_lea.sflag [#allocation6], 1
    %392 = vsyncpa %s391, 1
    %393 = vsyncpa [#allocation4], 1
    %s394 = scalar_lea.sflag [#allocation4], 1
    %395 = vsyncpa %s394, 1

</llo_original>
